<compile_context>
chip_gen: v6e
topology: v6e:2x2x1
jax: 0.10.0
libtpu: 0.0.40
codegen_flags: <defaults>
</compile_context>

<pallas_src>
import jax
import jax.numpy as jnp
from jax import lax
from jax.experimental import pallas as pl
from jax.experimental.pallas import tpu as pltpu


def _round_up(n, m):
    return ((n + m - 1) // m) * m


def mlp_kernel(x_ref, w1_ref, b1_ref, w2_ref, b2_ref,
               w3_ref, b3_ref, w4_ref, b4_ref, o_ref):
    # x_ref: (TILE_B, F) f32 ; w_i: (out, in) bf16 ; b_i: (out, 1) f32
    # Activations are kept transposed: (features, TILE_B) -> batch on lanes.
    x = x_ref[...].astype(jnp.bfloat16)                       # in-kernel cast (VPU)

    # fc1 + ReLU: contract over F -> (64, TILE_B), f32 accumulation on the MXU.
    h = lax.dot_general(w1_ref[...], x, (((1,), (1,)), ((), ())),
                        preferred_element_type=jnp.float32)
    h = jnp.maximum(h + b1_ref[...], 0.0)

    # fc2 + ReLU: (32, 64) @ (64, TILE_B)
    h = jnp.dot(w2_ref[...], h.astype(jnp.bfloat16),
                preferred_element_type=jnp.float32)
    h = jnp.maximum(h + b2_ref[...], 0.0)

    # fc3 + ReLU: (16, 32) @ (32, TILE_B)
    h = jnp.dot(w3_ref[...], h.astype(jnp.bfloat16),
                preferred_element_type=jnp.float32)
    h = jnp.maximum(h + b3_ref[...], 0.0)

    # fc4 + sigmoid: (1, 16) @ (16, TILE_B) -> (1, TILE_B)
    z = jnp.dot(w4_ref[...], h.astype(jnp.bfloat16),
                preferred_element_type=jnp.float32)
    z = z + b4_ref[...]
    # sigmoid = 1 / (1 + exp(-z)); exp and the approximate reciprocal run on the EUP.
    o_ref[...] = pl.reciprocal(1.0 + jnp.exp(-z), approx=True).astype(o_ref.dtype)


def neural_net_forward(x, params, tile_b=2048):
    """Forward pass of NeuralNet.  x: (B, input_size) float32 -> (B, 1) float32."""
    B, F = x.shape
    # Tile size: multiple of 128 (lane-dense output blocks), no bigger than needed.
    tile_b = max(128, min(_round_up(tile_b, 128), _round_up(B, 128)))
    b_pad = _round_up(B, tile_b)
    num_tiles = b_pad // tile_b

    xk = x
    if b_pad != B:
        # Pad the ragged tail so every grid step works on a full tile
        # (no OOB writes); padded rows are sliced off below.
        xk = jnp.pad(xk, ((0, b_pad - B), (0, 0)))

    wb = lambda k: params[k].astype(jnp.bfloat16)   # tiny, one-time conversion
    args = (xk,
            wb("w1"), params["b1"],
            wb("w2"), params["b2"],
            wb("w3"), params["b3"],
            wb("w4"), params["b4"])

    # Weights/biases: whole-array blocks with constant index_maps -> DMA'd once,
    # VMEM-resident across all grid steps.
    resident = lambda a: pl.BlockSpec(a.shape, lambda i: (0, 0))

    out = pl.pallas_call(
        mlp_kernel,
        out_shape=jax.ShapeDtypeStruct((1, b_pad), jnp.float32),
        grid=(num_tiles,),
        in_specs=[pl.BlockSpec((tile_b, F), lambda i: (i, 0))]
                 + [resident(a) for a in args[1:]],
        out_specs=pl.BlockSpec((1, tile_b), lambda i: (0, i)),
        compiler_params=pltpu.CompilerParams(
            dimension_semantics=("parallel",)),
    )(*args)

    return out[0, :B].reshape(B, 1)


def init_params(key, input_size):
    """PyTorch nn.Linear-style init: W (out,in), b (out,1), U(+-1/sqrt(fan_in))."""
    sizes = [(input_size, 64), (64, 32), (32, 16), (16, 1)]
    params = {}
    for i, (fan_in, fan_out) in enumerate(sizes, start=1):
        key, kw, kb = jax.random.split(key, 3)
        bound = 1.0 / (fan_in ** 0.5)
        params[f"w{i}"] = jax.random.uniform(
            kw, (fan_out, fan_in), jnp.float32, minval=-bound, maxval=bound)
        params[f"b{i}"] = jax.random.uniform(
            kb, (fan_out, 1), jnp.float32, minval=-bound, maxval=bound)
    return params


def reference_forward(x, params):
    """Pure-JAX reference mirroring the kernel's bf16-input / f32-accum math."""
    hp = jax.lax.Precision.HIGHEST
    up = lambda a: a.astype(jnp.bfloat16).astype(jnp.float32)
    h = up(x)
    for i in (1, 2, 3):
        w, b = up(params[f"w{i}"]), params[f"b{i}"]
        h = jnp.maximum(jnp.dot(h, w.T, precision=hp) + b.T, 0.0)
        h = up(h)  # kernel feeds bf16 activations into the next MXU pass
    w4, b4 = up(params["w4"]), params["b4"]
    z = jnp.dot(h, w4.T, precision=hp) + b4.T
    return jax.nn.sigmoid(z)


if __name__ == "__main__":
    key = jax.random.PRNGKey(0)
    k_params, k_x = jax.random.split(key)

    batch = 300          # deliberately NOT a multiple of the tile (tests padded tail)
    input_size = 32      # stands in for x_train.shape[1]

    params = init_params(k_params, input_size)
    x = jax.random.normal(k_x, (batch, input_size), dtype=jnp.float32)

    # Small tile -> 3-step parallel grid (exercises pipelining + padded last tile)...
    out = jax.block_until_ready(neural_net_forward(x, params, tile_b=128))
    # ...and the default configuration (one larger tile at this batch size).
    out_big = jax.block_until_ready(neural_net_forward(x, params))

    ref = reference_forward(x, params)
    assert out.shape == (batch, 1), out.shape
    assert jnp.allclose(out, ref, atol=2e-3, rtol=2e-3), "mismatch vs reference"
    assert jnp.allclose(out_big, out, atol=2e-3, rtol=2e-3), "tile-size dependence"

    print("KERNEL_OK")
</pallas_src>

<mosaic_0001>
module attributes {stable_mosaic.version = 11 : i64} {
  func.func @mlp_kernel(%arg0: i32, %arg1: memref<128x32xf32, #tpu.memory_space<vmem>>, %arg2: memref<64x32xbf16, #tpu.memory_space<vmem>>, %arg3: memref<64x1xf32, #tpu.memory_space<vmem>>, %arg4: memref<32x64xbf16, #tpu.memory_space<vmem>>, %arg5: memref<32x1xf32, #tpu.memory_space<vmem>>, %arg6: memref<16x32xbf16, #tpu.memory_space<vmem>>, %arg7: memref<16x1xf32, #tpu.memory_space<vmem>>, %arg8: memref<1x16xbf16, #tpu.memory_space<vmem>>, %arg9: memref<1x1xf32, #tpu.memory_space<vmem>>, %arg10: memref<1x128xf32, #tpu.memory_space<vmem>>) attributes {dimension_semantics = [#tpu.dimension_semantics<parallel>], iteration_bounds = array<i64: 3>, scalar_prefetch = 0 : i64, scratch_operands = 0 : i64, tpu.core_type = #tpu.core_type<tc>, window_params = [{transform_indices = @transform_0, window_bounds = array<i64: 128, 32>}, {pipeline_mode = #tpu.pipeline_mode<synchronous>, transform_indices = @transform_1, window_bounds = array<i64: 64, 32>}, {pipeline_mode = #tpu.pipeline_mode<synchronous>, transform_indices = @transform_2, window_bounds = array<i64: 64, 1>}, {pipeline_mode = #tpu.pipeline_mode<synchronous>, transform_indices = @transform_3, window_bounds = array<i64: 32, 64>}, {pipeline_mode = #tpu.pipeline_mode<synchronous>, transform_indices = @transform_4, window_bounds = array<i64: 32, 1>}, {pipeline_mode = #tpu.pipeline_mode<synchronous>, transform_indices = @transform_5, window_bounds = array<i64: 16, 32>}, {pipeline_mode = #tpu.pipeline_mode<synchronous>, transform_indices = @transform_6, window_bounds = array<i64: 16, 1>}, {pipeline_mode = #tpu.pipeline_mode<synchronous>, transform_indices = @transform_7, window_bounds = array<i64: 1, 16>}, {pipeline_mode = #tpu.pipeline_mode<synchronous>, transform_indices = @transform_8, window_bounds = array<i64: 1, 1>}, {transform_indices = @transform_9, window_bounds = array<i64: 1, 128>}]} {
    %c0 = arith.constant 0 : index
    %c0_0 = arith.constant 0 : index
    %0 = vector.load %arg1[%c0, %c0_0] : memref<128x32xf32, #tpu.memory_space<vmem>>, vector<128x32xf32>
    %1 = arith.truncf %0 : vector<128x32xf32> to vector<128x32xbf16>
    %c0_1 = arith.constant 0 : index
    %c0_2 = arith.constant 0 : index
    %2 = vector.load %arg2[%c0_1, %c0_2] : memref<64x32xbf16, #tpu.memory_space<vmem>>, vector<64x32xbf16>
    %cst = arith.constant dense<0.000000e+00> : vector<64x128xf32>
    %3 = tpu.matmul %2, %1, %cst {dimension_numbers = #tpu.dot_dimension_numbers<[1], [1], [0], [0], [0, 0, 1, 0], [], []>} : vector<64x32xbf16>, vector<128x32xbf16>, vector<64x128xf32> -> vector<64x128xf32>
    %c0_3 = arith.constant 0 : index
    %c0_4 = arith.constant 0 : index
    %4 = vector.load %arg3[%c0_3, %c0_4] : memref<64x1xf32, #tpu.memory_space<vmem>>, vector<64x1xf32>
    %5 = vector.broadcast %4 : vector<64x1xf32> to vector<64x128xf32>
    %6 = arith.addf %3, %5 : vector<64x128xf32>
    %cst_5 = arith.constant 0.000000e+00 : f32
    %7 = vector.broadcast %cst_5 : f32 to vector<64x128xf32>
    %8 = arith.maximumf %6, %7 : vector<64x128xf32>
    %c0_6 = arith.constant 0 : index
    %c0_7 = arith.constant 0 : index
    %9 = vector.load %arg4[%c0_6, %c0_7] : memref<32x64xbf16, #tpu.memory_space<vmem>>, vector<32x64xbf16>
    %10 = arith.truncf %8 : vector<64x128xf32> to vector<64x128xbf16>
    %cst_8 = arith.constant dense<0.000000e+00> : vector<32x128xf32>
    %11 = tpu.matmul %9, %10, %cst_8 {dimension_numbers = #tpu.dot_dimension_numbers<[1], [0], [0], [1], [0, 0, 1, 1], [], []>} : vector<32x64xbf16>, vector<64x128xbf16>, vector<32x128xf32> -> vector<32x128xf32>
    %c0_9 = arith.constant 0 : index
    %c0_10 = arith.constant 0 : index
    %12 = vector.load %arg5[%c0_9, %c0_10] : memref<32x1xf32, #tpu.memory_space<vmem>>, vector<32x1xf32>
    %13 = vector.broadcast %12 : vector<32x1xf32> to vector<32x128xf32>
    %14 = arith.addf %11, %13 : vector<32x128xf32>
    %cst_11 = arith.constant 0.000000e+00 : f32
    %15 = vector.broadcast %cst_11 : f32 to vector<32x128xf32>
    %16 = arith.maximumf %14, %15 : vector<32x128xf32>
    %c0_12 = arith.constant 0 : index
    %c0_13 = arith.constant 0 : index
    %17 = vector.load %arg6[%c0_12, %c0_13] : memref<16x32xbf16, #tpu.memory_space<vmem>>, vector<16x32xbf16>
    %18 = arith.truncf %16 : vector<32x128xf32> to vector<32x128xbf16>
    %cst_14 = arith.constant dense<0.000000e+00> : vector<16x128xf32>
    %19 = tpu.matmul %17, %18, %cst_14 {dimension_numbers = #tpu.dot_dimension_numbers<[1], [0], [0], [1], [0, 0, 1, 1], [], []>} : vector<16x32xbf16>, vector<32x128xbf16>, vector<16x128xf32> -> vector<16x128xf32>
    %c0_15 = arith.constant 0 : index
    %c0_16 = arith.constant 0 : index
    %20 = vector.load %arg7[%c0_15, %c0_16] : memref<16x1xf32, #tpu.memory_space<vmem>>, vector<16x1xf32>
    %21 = vector.broadcast %20 : vector<16x1xf32> to vector<16x128xf32>
    %22 = arith.addf %19, %21 : vector<16x128xf32>
    %cst_17 = arith.constant 0.000000e+00 : f32
    %23 = vector.broadcast %cst_17 : f32 to vector<16x128xf32>
    %24 = arith.maximumf %22, %23 : vector<16x128xf32>
    %c0_18 = arith.constant 0 : index
    %c0_19 = arith.constant 0 : index
    %25 = vector.load %arg8[%c0_18, %c0_19] : memref<1x16xbf16, #tpu.memory_space<vmem>>, vector<1x16xbf16>
    %26 = arith.truncf %24 : vector<16x128xf32> to vector<16x128xbf16>
    %cst_20 = arith.constant dense<0.000000e+00> : vector<1x128xf32>
    %27 = tpu.matmul %25, %26, %cst_20 {dimension_numbers = #tpu.dot_dimension_numbers<[1], [0], [0], [1], [0, 0, 1, 1], [], []>} : vector<1x16xbf16>, vector<16x128xbf16>, vector<1x128xf32> -> vector<1x128xf32>
    %c0_21 = arith.constant 0 : index
    %c0_22 = arith.constant 0 : index
    %28 = vector.load %arg9[%c0_21, %c0_22] : memref<1x1xf32, #tpu.memory_space<vmem>>, vector<1x1xf32>
    %29 = vector.broadcast %28 : vector<1x1xf32> to vector<1x128xf32>
    %30 = arith.addf %27, %29 : vector<1x128xf32>
    %cst_23 = arith.constant 0.000000e+00 : f32
    %31 = vector.broadcast %cst_23 : f32 to vector<1x128xf32>
    %32 = arith.subf %31, %30 : vector<1x128xf32>
    %33 = math.exp %32 : vector<1x128xf32>
    %cst_24 = arith.constant 1.000000e+00 : f32
    %34 = vector.broadcast %cst_24 : f32 to vector<1x128xf32>
    %35 = arith.addf %34, %33 : vector<1x128xf32>
    %36 = tpu.reciprocal %35 {approx = true} : vector<1x128xf32> -> vector<1x128xf32>
    %c0_25 = arith.constant 0 : index
    %c0_26 = arith.constant 0 : index
    %37 = vector.load %arg10[%c0_25, %c0_26] : memref<1x128xf32, #tpu.memory_space<vmem>>, vector<1x128xf32>
    tpu.vector_store %arg10[%c0_25, %c0_26], %36 {strides = array<i32>} : memref<1x128xf32, #tpu.memory_space<vmem>>, vector<1x128xf32>,
    return
  }
  func.func @transform_0(%arg0: i32) -> (i32, i32) {
    %c0_i32 = arith.constant 0 : i32
    %c0_i32_0 = arith.constant 0 : i32
    return %arg0, %c0_i32 : i32, i32
  }
  func.func @transform_1(%arg0: i32) -> (i32, i32) {
    %c0_i32 = arith.constant 0 : i32
    %c0_i32_0 = arith.constant 0 : i32
    %c0_i32_1 = arith.constant 0 : i32
    return %c0_i32, %c0_i32_0 : i32, i32
  }
  func.func @transform_2(%arg0: i32) -> (i32, i32) {
    %c0_i32 = arith.constant 0 : i32
    %c0_i32_0 = arith.constant 0 : i32
    %c0_i32_1 = arith.constant 0 : i32
    return %c0_i32, %c0_i32_0 : i32, i32
  }
  func.func @transform_3(%arg0: i32) -> (i32, i32) {
    %c0_i32 = arith.constant 0 : i32
    %c0_i32_0 = arith.constant 0 : i32
    %c0_i32_1 = arith.constant 0 : i32
    return %c0_i32, %c0_i32_0 : i32, i32
  }
  func.func @transform_4(%arg0: i32) -> (i32, i32) {
    %c0_i32 = arith.constant 0 : i32
    %c0_i32_0 = arith.constant 0 : i32
    %c0_i32_1 = arith.constant 0 : i32
    return %c0_i32, %c0_i32_0 : i32, i32
  }
  func.func @transform_5(%arg0: i32) -> (i32, i32) {
    %c0_i32 = arith.constant 0 : i32
    %c0_i32_0 = arith.constant 0 : i32
    %c0_i32_1 = arith.constant 0 : i32
    return %c0_i32, %c0_i32_0 : i32, i32
  }
  func.func @transform_6(%arg0: i32) -> (i32, i32) {
    %c0_i32 = arith.constant 0 : i32
    %c0_i32_0 = arith.constant 0 : i32
    %c0_i32_1 = arith.constant 0 : i32
    return %c0_i32, %c0_i32_0 : i32, i32
  }
  func.func @transform_7(%arg0: i32) -> (i32, i32) {
    %c0_i32 = arith.constant 0 : i32
    %c0_i32_0 = arith.constant 0 : i32
    %c0_i32_1 = arith.constant 0 : i32
    return %c0_i32, %c0_i32_0 : i32, i32
  }
  func.func @transform_8(%arg0: i32) -> (i32, i32) {
    %c0_i32 = arith.constant 0 : i32
    %c0_i32_0 = arith.constant 0 : i32
    %c0_i32_1 = arith.constant 0 : i32
    return %c0_i32, %c0_i32_0 : i32, i32
  }
  func.func @transform_9(%arg0: i32) -> (i32, i32) {
    %c0_i32 = arith.constant 0 : i32
    %c0_i32_0 = arith.constant 0 : i32
    return %c0_i32, %arg0 : i32, i32
  }
}

</mosaic_0001>

<llo_original>
// kernel: tpu_custom_call.1
$region0: #{tpu_custom_call.1}
  #allocation0 [shape = 'u32[]', space=smem, size = 0x4, offset = 0x4, fixed_abs, tag = 'smem constant byte address 0x4 - core index']
  #allocation1 [shape = 'u32[144,128]{1,0:T(1,128)}', space=vmem, size = 0x12000, scoped, tag = 'internal scratch']
  #allocation2 [shape = 'f32[1,1]{1,0:T(1,128)S(1)}', space=vmem, size = 0x200, scoped, tag = 'scoped memory for tpu_custom_call.1']
  %s0 = inlined_call_operand.vmem [shape: f32[384,32], index: 0, kind: input, shape index: {}]
  %s1 = inlined_call_operand.vmem [shape: bf16[64,32], index: 1, kind: input, shape index: {}]
  %s2 = inlined_call_operand.vmem [shape: f32[64,1], index: 2, kind: input, shape index: {}]
  %s3 = inlined_call_operand.vmem [shape: bf16[32,64], index: 3, kind: input, shape index: {}]
  %s4 = inlined_call_operand.vmem [shape: f32[32,1], index: 4, kind: input, shape index: {}]
  %s5 = inlined_call_operand.vmem [shape: bf16[16,32], index: 5, kind: input, shape index: {}]
  %s6 = inlined_call_operand.vmem [shape: f32[16,1], index: 6, kind: input, shape index: {}]
  %s7 = inlined_call_operand.vmem [shape: bf16[1,16], index: 7, kind: input, shape index: {}]
  %s8 = inlined_call_operand.<no memory space> [shape: f32[1,1], index: 8, kind: input, shape index: {}]
  %s9 = inlined_call_operand.hbm [shape: f32[1,384], index: 9, kind: output, shape index: {}]
  %s10 = sld [smem:[#allocation0]]
  $region69: #{tpu_custom_call.1} parent=0
    _
  %s12 = ssub.s32 1, %s10
  %s13 = scalar_select 0, %s12, %s10
  %v14 = vstv %s8
  %15 = vst [vmem:[#allocation2] sm:$0x1] %v14
  $region1: #{tpu_custom_call.1} parent=0
    #allocation3 [shape = 'u8[1024]{0}', space=vmem, size = 0x400, scoped, tag = 'output window, operand 0']
    #allocation4 [shape = 's32[2]{0}', space=sflag, size = 0x8, scoped, tag = 'scoped memory for tpu_custom_call.1']
    %16 = vsyncpa [#allocation4], 0
    %s17 = scalar_lea.sflag [#allocation4], 1
    %18 = vsyncpa %s17, 0
    loop: start=0, step=1, limit=5
    $region2: #{tpu_custom_call.1} parent=1 // loop_pre_header
      _
    $region3: #{tpu_custom_call.1} parent=1 // loop_header
      %s20 = sphi 0, %s24
      %p21 = scmp.ge.s32.totalorder %s20, 5
      %s30 = sphi 0, %s32
      %s33 = sphi 0, %s30
      %s34 = sphi 0, %s33
      %s50 = sphi 0, %s34
      %s54 = sphi 0, %s54
      %s56 = sphi 0, %s54
      %s57 = sphi 0, %s56
      %s71 = sphi 0, %s57
      %s75 = sphi 0, %s75
      %s77 = sphi 0, %s75
      %s78 = sphi 0, %s77
      %s92 = sphi 0, %s78
      %s96 = sphi 0, %s96
      %s98 = sphi 0, %s96
      %s99 = sphi 0, %s98
      %s113 = sphi 0, %s99
      %s117 = sphi 0, %s117
      %s119 = sphi 0, %s117
      %s120 = sphi 0, %s119
      %s134 = sphi 0, %s120
      %s138 = sphi 0, %s138
      %s140 = sphi 0, %s138
      %s141 = sphi 0, %s140
      %s155 = sphi 0, %s141
      %s159 = sphi 0, %s159
      %s161 = sphi 0, %s159
      %s162 = sphi 0, %s161
      %s176 = sphi 0, %s162
      %s180 = sphi 0, %s180
      %s182 = sphi 0, %s180
      %s183 = sphi 0, %s182
      %s197 = sphi 0, %s183
      %s201 = sphi 0, %s201
      %s203 = sphi 0, %s201
      %s204 = sphi 0, %s203
      %s218 = sphi 0, %s204
      %s224 = sphi 0, %s226
      %s227 = sphi 0, %s224
      %s228 = sphi 0, %s227
      %s244 = sphi 0, %s228
    $region4: #{tpu_custom_call.1} parent=1 // loop_header_branch
      %23 = sbr.rel (%p21) target = $region8
    $region5: #{tpu_custom_call.1} parent=1 // loop_body
      %s25 = ssub.s32 %s20, 1
      %s26 = ssub.s32 %s20, 2
      %s27 = sadd.s32 %s20, 1
      %s28 = ssub.s32 %s20, %s27
      %p29 = scmp.eq.s32.totalorder %s28, 0
      %s31 = sadd.s32 %s30, 1
      %s32 = scalar_select %p29, %s30, %s31
      %p35 = pneg %p29
      %p36 = scmp.eq.s32.totalorder %s20, 2
      %p37 = por %p35, %p36
      %p38 = scmp.ne.s32.totalorder %s30, %s33
      %p39 = scmp.eq.s32.totalorder %s20, 0
      %p40 = por %p38, %p39
      %p41 = scmp.ne.s32.totalorder %s30, %s33
      %p42 = scmp.eq.s32.totalorder %s25, 2
      %p43 = por %p41, %p42
      %p44 = scmp.ne.s32.totalorder %s33, %s34
      %p45 = scmp.eq.s32.totalorder %s25, 0
      %p46 = por %p44, %p45
      %p47 = scmp.ne.s32.totalorder %s33, %s34
      %p48 = scmp.eq.s32.totalorder %s26, 2
      %p49 = por %p47, %p48
      %p51 = scmp.ne.s32.totalorder %s34, %s50
      %p52 = scmp.eq.s32.totalorder %s26, 0
      %p53 = por %p51, %p52
      %s55 = sadd.s32 %s54, 1
      %p58 = scmp.eq.s32.totalorder %s20, 2
      %p59 = scmp.ne.s32.totalorder %s54, %s56
      %p60 = scmp.eq.s32.totalorder %s20, 0
      %p61 = por %p59, %p60
      %p62 = scmp.ne.s32.totalorder %s54, %s56
      %p63 = scmp.eq.s32.totalorder %s25, 2
      %p64 = por %p62, %p63
      %p65 = scmp.ne.s32.totalorder %s56, %s57
      %p66 = scmp.eq.s32.totalorder %s25, 0
      %p67 = por %p65, %p66
      %p68 = scmp.ne.s32.totalorder %s56, %s57
      %p69 = scmp.eq.s32.totalorder %s26, 2
      %p70 = por %p68, %p69
      %p72 = scmp.ne.s32.totalorder %s57, %s71
      %p73 = scmp.eq.s32.totalorder %s26, 0
      %p74 = por %p72, %p73
      %s76 = sadd.s32 %s75, 1
      %p79 = scmp.eq.s32.totalorder %s20, 2
      %p80 = scmp.ne.s32.totalorder %s75, %s77
      %p81 = scmp.eq.s32.totalorder %s20, 0
      %p82 = por %p80, %p81
      %p83 = scmp.ne.s32.totalorder %s75, %s77
      %p84 = scmp.eq.s32.totalorder %s25, 2
      %p85 = por %p83, %p84
      %p86 = scmp.ne.s32.totalorder %s77, %s78
      %p87 = scmp.eq.s32.totalorder %s25, 0
      %p88 = por %p86, %p87
      %p89 = scmp.ne.s32.totalorder %s77, %s78
      %p90 = scmp.eq.s32.totalorder %s26, 2
      %p91 = por %p89, %p90
      %p93 = scmp.ne.s32.totalorder %s78, %s92
      %p94 = scmp.eq.s32.totalorder %s26, 0
      %p95 = por %p93, %p94
      %s97 = sadd.s32 %s96, 1
      %p100 = scmp.eq.s32.totalorder %s20, 2
      %p101 = scmp.ne.s32.totalorder %s96, %s98
      %p102 = scmp.eq.s32.totalorder %s20, 0
      %p103 = por %p101, %p102
      %p104 = scmp.ne.s32.totalorder %s96, %s98
      %p105 = scmp.eq.s32.totalorder %s25, 2
      %p106 = por %p104, %p105
      %p107 = scmp.ne.s32.totalorder %s98, %s99
      %p108 = scmp.eq.s32.totalorder %s25, 0
      %p109 = por %p107, %p108
      %p110 = scmp.ne.s32.totalorder %s98, %s99
      %p111 = scmp.eq.s32.totalorder %s26, 2
      %p112 = por %p110, %p111
      %p114 = scmp.ne.s32.totalorder %s99, %s113
      %p115 = scmp.eq.s32.totalorder %s26, 0
      %p116 = por %p114, %p115
      %s118 = sadd.s32 %s117, 1
      %p121 = scmp.eq.s32.totalorder %s20, 2
      %p122 = scmp.ne.s32.totalorder %s117, %s119
      %p123 = scmp.eq.s32.totalorder %s20, 0
      %p124 = por %p122, %p123
      %p125 = scmp.ne.s32.totalorder %s117, %s119
      %p126 = scmp.eq.s32.totalorder %s25, 2
      %p127 = por %p125, %p126
      %p128 = scmp.ne.s32.totalorder %s119, %s120
      %p129 = scmp.eq.s32.totalorder %s25, 0
      %p130 = por %p128, %p129
      %p131 = scmp.ne.s32.totalorder %s119, %s120
      %p132 = scmp.eq.s32.totalorder %s26, 2
      %p133 = por %p131, %p132
      %p135 = scmp.ne.s32.totalorder %s120, %s134
      %p136 = scmp.eq.s32.totalorder %s26, 0
      %p137 = por %p135, %p136
      %s139 = sadd.s32 %s138, 1
      %p142 = scmp.eq.s32.totalorder %s20, 2
      %p143 = scmp.ne.s32.totalorder %s138, %s140
      %p144 = scmp.eq.s32.totalorder %s20, 0
      %p145 = por %p143, %p144
      %p146 = scmp.ne.s32.totalorder %s138, %s140
      %p147 = scmp.eq.s32.totalorder %s25, 2
      %p148 = por %p146, %p147
      %p149 = scmp.ne.s32.totalorder %s140, %s141
      %p150 = scmp.eq.s32.totalorder %s25, 0
      %p151 = por %p149, %p150
      %p152 = scmp.ne.s32.totalorder %s140, %s141
      %p153 = scmp.eq.s32.totalorder %s26, 2
      %p154 = por %p152, %p153
      %p156 = scmp.ne.s32.totalorder %s141, %s155
      %p157 = scmp.eq.s32.totalorder %s26, 0
      %p158 = por %p156, %p157
      %s160 = sadd.s32 %s159, 1
      %p163 = scmp.eq.s32.totalorder %s20, 2
      %p164 = scmp.ne.s32.totalorder %s159, %s161
      %p165 = scmp.eq.s32.totalorder %s20, 0
      %p166 = por %p164, %p165
      %p167 = scmp.ne.s32.totalorder %s159, %s161
      %p168 = scmp.eq.s32.totalorder %s25, 2
      %p169 = por %p167, %p168
      %p170 = scmp.ne.s32.totalorder %s161, %s162
      %p171 = scmp.eq.s32.totalorder %s25, 0
      %p172 = por %p170, %p171
      %p173 = scmp.ne.s32.totalorder %s161, %s162
      %p174 = scmp.eq.s32.totalorder %s26, 2
      %p175 = por %p173, %p174
      %p177 = scmp.ne.s32.totalorder %s162, %s176
      %p178 = scmp.eq.s32.totalorder %s26, 0
      %p179 = por %p177, %p178
      %s181 = sadd.s32 %s180, 1
      %p184 = scmp.eq.s32.totalorder %s20, 2
      %p185 = scmp.ne.s32.totalorder %s180, %s182
      %p186 = scmp.eq.s32.totalorder %s20, 0
      %p187 = por %p185, %p186
      %p188 = scmp.ne.s32.totalorder %s180, %s182
      %p189 = scmp.eq.s32.totalorder %s25, 2
      %p190 = por %p188, %p189
      %p191 = scmp.ne.s32.totalorder %s182, %s183
      %p192 = scmp.eq.s32.totalorder %s25, 0
      %p193 = por %p191, %p192
      %p194 = scmp.ne.s32.totalorder %s182, %s183
      %p195 = scmp.eq.s32.totalorder %s26, 2
      %p196 = por %p194, %p195
      %p198 = scmp.ne.s32.totalorder %s183, %s197
      %p199 = scmp.eq.s32.totalorder %s26, 0
      %p200 = por %p198, %p199
      %s202 = sadd.s32 %s201, 1
      %p205 = scmp.eq.s32.totalorder %s20, 2
      %p206 = scmp.ne.s32.totalorder %s201, %s203
      %p207 = scmp.eq.s32.totalorder %s20, 0
      %p208 = por %p206, %p207
      %p209 = scmp.ne.s32.totalorder %s201, %s203
      %p210 = scmp.eq.s32.totalorder %s25, 2
      %p211 = por %p209, %p210
      %p212 = scmp.ne.s32.totalorder %s203, %s204
      %p213 = scmp.eq.s32.totalorder %s25, 0
      %p214 = por %p212, %p213
      %p215 = scmp.ne.s32.totalorder %s203, %s204
      %p216 = scmp.eq.s32.totalorder %s26, 2
      %p217 = por %p215, %p216
      %p219 = scmp.ne.s32.totalorder %s204, %s218
      %p220 = scmp.eq.s32.totalorder %s26, 0
      %p221 = por %p219, %p220
      %s222 = ssub.s32 %s20, %s27
      %p223 = scmp.eq.s32.totalorder %s222, 0
      %s225 = sadd.s32 %s224, 1
      %s226 = scalar_select %p223, %s224, %s225
      %p229 = pneg %p223
      %p230 = scmp.eq.s32.totalorder %s20, 2
      %p231 = por %p229, %p230
      %p232 = scmp.ne.s32.totalorder %s224, %s227
      %p233 = scmp.eq.s32.totalorder %s20, 0
      %p234 = por %p232, %p233
      %p235 = scmp.ne.s32.totalorder %s224, %s227
      %p236 = scmp.eq.s32.totalorder %s25, 2
      %p237 = por %p235, %p236
      %p238 = scmp.ne.s32.totalorder %s227, %s228
      %p239 = scmp.eq.s32.totalorder %s25, 0
      %p240 = por %p238, %p239
      %p241 = scmp.ne.s32.totalorder %s227, %s228
      %p242 = scmp.eq.s32.totalorder %s26, 2
      %p243 = por %p241, %p242
      %p245 = scmp.ne.s32.totalorder %s228, %s244
      %p246 = scmp.eq.s32.totalorder %s26, 0
      %p247 = por %p245, %p246
      %p248 = scmp.le.s32.totalorder 1, %s20
      %p249 = scmp.lt.s32.totalorder %s20, 4
      %p250 = pnand %p248, %p249
      %p251 = pneg %p250
      // Predicated region
      $region9: #{tpu_custom_call.1} parent=5 // pred_check
        _
      $region10: #{tpu_custom_call.1} parent=5 // pred_check_branch
        %253 = sbr.rel (%p250) target = $region12
      $region11: #{tpu_custom_call.1} parent=5 // pred_region
        %s254 = ssub.s32 %s20, 1
        // Predicated region
        $region13: #{tpu_custom_call.1} parent=11 // pred_check
          %p255 = pneg %p67
        $region14: #{tpu_custom_call.1} parent=11 // pred_check_branch
          %257 = sbr.rel (%p255) target = $region16
        $region15: #{tpu_custom_call.1} parent=11 // pred_region
          _
        $region16: #{tpu_custom_call.1} parent=11 // pred_fallthru
          _
        // Predicated region
        $region17: #{tpu_custom_call.1} parent=11 // pred_check
          %p258 = pneg %p88
        $region18: #{tpu_custom_call.1} parent=11 // pred_check_branch
          %260 = sbr.rel (%p258) target = $region20
        $region19: #{tpu_custom_call.1} parent=11 // pred_region
          _
        $region20: #{tpu_custom_call.1} parent=11 // pred_fallthru
          _
        // Predicated region
        $region21: #{tpu_custom_call.1} parent=11 // pred_check
          %p261 = pneg %p109
        $region22: #{tpu_custom_call.1} parent=11 // pred_check_branch
          %263 = sbr.rel (%p261) target = $region24
        $region23: #{tpu_custom_call.1} parent=11 // pred_region
          _
        $region24: #{tpu_custom_call.1} parent=11 // pred_fallthru
          _
        // Predicated region
        $region25: #{tpu_custom_call.1} parent=11 // pred_check
          %p264 = pneg %p130
        $region26: #{tpu_custom_call.1} parent=11 // pred_check_branch
          %266 = sbr.rel (%p264) target = $region28
        $region27: #{tpu_custom_call.1} parent=11 // pred_region
          _
        $region28: #{tpu_custom_call.1} parent=11 // pred_fallthru
          _
        // Predicated region
        $region29: #{tpu_custom_call.1} parent=11 // pred_check
          %p267 = pneg %p151
        $region30: #{tpu_custom_call.1} parent=11 // pred_check_branch
          %269 = sbr.rel (%p267) target = $region32
        $region31: #{tpu_custom_call.1} parent=11 // pred_region
          _
        $region32: #{tpu_custom_call.1} parent=11 // pred_fallthru
          _
        // Predicated region
        $region33: #{tpu_custom_call.1} parent=11 // pred_check
          %p270 = pneg %p172
        $region34: #{tpu_custom_call.1} parent=11 // pred_check_branch
          %272 = sbr.rel (%p270) target = $region36
        $region35: #{tpu_custom_call.1} parent=11 // pred_region
          _
        $region36: #{tpu_custom_call.1} parent=11 // pred_fallthru
          _
        // Predicated region
        $region37: #{tpu_custom_call.1} parent=11 // pred_check
          %p273 = pneg %p193
        $region38: #{tpu_custom_call.1} parent=11 // pred_check_branch
          %275 = sbr.rel (%p273) target = $region40
        $region39: #{tpu_custom_call.1} parent=11 // pred_region
          _
        $region40: #{tpu_custom_call.1} parent=11 // pred_fallthru
          _
        // Predicated region
        $region41: #{tpu_custom_call.1} parent=11 // pred_check
          %p276 = pneg %p214
        $region42: #{tpu_custom_call.1} parent=11 // pred_check_branch
          %278 = sbr.rel (%p276) target = $region44
        $region43: #{tpu_custom_call.1} parent=11 // pred_region
          _
        $region44: #{tpu_custom_call.1} parent=11 // pred_fallthru
          _
      $region12: #{tpu_custom_call.1} parent=5 // pred_fallthru
        _
      %p279 = scmp.lt.s32.totalorder %s20, 3
      // Predicated region
      $region45: #{tpu_custom_call.1} parent=5 // pred_check
        %p280 = pneg %p279
      $region46: #{tpu_custom_call.1} parent=5 // pred_check_branch
        %282 = sbr.rel (%p280) target = $region48
      $region47: #{tpu_custom_call.1} parent=5 // pred_region
        // Predicated region
        $region49: #{tpu_custom_call.1} parent=47 // pred_check
          %p283 = pneg %p40
        $region50: #{tpu_custom_call.1} parent=47 // pred_check_branch
          %285 = sbr.rel (%p283) target = $region52
        $region51: #{tpu_custom_call.1} parent=47 // pred_region
          %s286 = smul.u32 16, %s20
          %p287 = scmp.lt.s32.totalorder %s286, 47
          %s288 = scalar_select %p287, %s286, 47
          %s289 = smul.addr %s288, 8
          %s290 = scalar_lea.vmem %s0, %s289
          %s291 = smul.u32 16, %s20
        $region52: #{tpu_custom_call.1} parent=47 // pred_fallthru
          _
      $region48: #{tpu_custom_call.1} parent=5 // pred_fallthru
        _
      %p292 = scmp.le.s32.totalorder 1, %s20
      %p293 = scmp.lt.s32.totalorder %s20, 4
      %p294 = pnand %p292, %p293
      %p295 = pneg %p294
      // Predicated region
      $region53: #{tpu_custom_call.1} parent=5 // pred_check
        _
      $region54: #{tpu_custom_call.1} parent=5 // pred_check_branch
        %297 = sbr.rel (%p294) target = $region56
      $region55: #{tpu_custom_call.1} parent=5 // pred_region
        %s298 = ssub.s32 %s20, 1
        %s299 = smul.u32 16, %s25
        %p300 = scmp.lt.s32.totalorder %s299, 47
        %s301 = scalar_select %p300, %s299, 47
        %s302 = smul.addr %s301, 8
        %s303 = scalar_lea.vmem %s0, %s302
        %p304 = pneg %p46
        %p305 = pneg %p43
        %p306 = pneg %p67
        %p307 = pneg %p64
        %p308 = pneg %p88
        %p309 = pneg %p85
        %p310 = pneg %p109
        %p311 = pneg %p106
        %p312 = pneg %p130
        %p313 = pneg %p127
        %p314 = pneg %p151
        %p315 = pneg %p148
        %p316 = pneg %p172
        %p317 = pneg %p169
        %p318 = pneg %p193
        %p319 = pneg %p190
        %p320 = pneg %p214
        %p321 = pneg %p211
        %p322 = pneg %p240
        %p323 = pneg %p237
        %s324 = sand.u32 %s227, 1
        %s325 = scalar_lea.sflag [#allocation4], %s324
        %s326 = sand.u32 %s227, 1
        %s327 = scalar_lea.vmem [#allocation3], %s326
        %s328 = smul.u32 16, %s25
        %p329 = scmp.lt.s32.totalorder %s328, 47
        %s330 = scalar_select %p329, %s328, 47
        %s331 = smul.addr %s330, 8
        %s332 = scalar_lea.vmem %s0, %s331
        %s333 = smul.u32 16, %s25
        %v335 = vld [vmem:[%s332] sm:$0xff]
        %v336 = vld [vmem:[%s332 + $0x8] sm:$0xff]
        %v337 = vld [vmem:[%s332 + $0x10] sm:$0xff]
        %v338 = vld [vmem:[%s332 + $0x18] sm:$0xff]
        %v339 = vld [vmem:[%s332 + $0x20] sm:$0xff]
        %v340 = vld [vmem:[%s332 + $0x28] sm:$0xff]
        %v341 = vld [vmem:[%s332 + $0x30] sm:$0xff]
        %v342 = vld [vmem:[%s332 + $0x38] sm:$0xff]
        %v343 = vld [vmem:[%s332 + $0x40] sm:$0xff]
        %v344 = vld [vmem:[%s332 + $0x48] sm:$0xff]
        %v345 = vld [vmem:[%s332 + $0x50] sm:$0xff]
        %v346 = vld [vmem:[%s332 + $0x58] sm:$0xff]
        %v347 = vld [vmem:[%s332 + $0x60] sm:$0xff]
        %v348 = vld [vmem:[%s332 + $0x68] sm:$0xff]
        %v349 = vld [vmem:[%s332 + $0x70] sm:$0xff]
        %v350 = vld [vmem:[%s332 + $0x78] sm:$0xff]
        %v351 = vpack.c.bf16 %v336, %v335
        %v352 = vpack.c.bf16 %v338, %v337
        %v353 = vpack.c.bf16 %v340, %v339
        %v354 = vpack.c.bf16 %v342, %v341
        %v355 = vpack.c.bf16 %v344, %v343
        %v356 = vpack.c.bf16 %v346, %v345
        %v357 = vpack.c.bf16 %v348, %v347
        %v358 = vpack.c.bf16 %v350, %v349
        %v359 = vld [vmem:[%s1] sm:$0xf]
        %v360 = vld [vmem:[%s1 + $0x4] sm:$0xf]
        %v361 = vld [vmem:[%s1 + $0x8] sm:$0xf]
        %v362 = vld [vmem:[%s1 + $0xc] sm:$0xf]
        %v363 = vld [vmem:[%s1 + $0x10] sm:$0xf]
        %v364 = vld [vmem:[%s1 + $0x14] sm:$0xf]
        %v365 = vld [vmem:[%s1 + $0x18] sm:$0xf]
        %v366 = vld [vmem:[%s1 + $0x1c] sm:$0xf]
        %v367 = vld [vmem:[%s2] sm:$0xff]
        %v368 = vld [vmem:[%s2 + $0x8] sm:$0xff]
        %v369 = vld [vmem:[%s2 + $0x10] sm:$0xff]
        %v370 = vld [vmem:[%s2 + $0x18] sm:$0xff]
        %v371 = vld [vmem:[%s2 + $0x20] sm:$0xff]
        %v372 = vld [vmem:[%s2 + $0x28] sm:$0xff]
        %v373 = vld [vmem:[%s2 + $0x30] sm:$0xff]
        %v374 = vld [vmem:[%s2 + $0x38] sm:$0xff]
        %376 = vset.pattern.permute.xlu0 0
        %377 = vperm.xlu0 %376, %v367
        %v378 = vpop.permute.xlu0 %377
        %381 = vset.pattern.permute.xlu0 0
        %382 = vperm.xlu0 %381, %v368
        %v383 = vpop.permute.xlu0 %382
        %386 = vset.pattern.permute.xlu0 0
        %387 = vperm.xlu0 %386, %v369
        %v388 = vpop.permute.xlu0 %387
        %391 = vset.pattern.permute.xlu0 0
        %392 = vperm.xlu0 %391, %v370
        %v393 = vpop.permute.xlu0 %392
        %396 = vset.pattern.permute.xlu0 0
        %397 = vperm.xlu0 %396, %v371
        %v398 = vpop.permute.xlu0 %397
        %401 = vset.pattern.permute.xlu0 0
        %402 = vperm.xlu0 %401, %v372
        %v403 = vpop.permute.xlu0 %402
        %406 = vset.pattern.permute.xlu0 0
        %407 = vperm.xlu0 %406, %v373
        %v408 = vpop.permute.xlu0 %407
        %411 = vset.pattern.permute.xlu0 0
        %412 = vperm.xlu0 %411, %v374
        %v413 = vpop.permute.xlu0 %412
        %v423 = vunpack.c.l.b16 %v359
        %v424 = vunpack.c.l.b16 %v360
        %v425 = vunpack.c.l.b16 %v361
        %v426 = vunpack.c.l.b16 %v362
        %v427 = vunpack.c.l.b16 %v363
        %v428 = vunpack.c.l.b16 %v364
        %v429 = vunpack.c.l.b16 %v365
        %v430 = vunpack.c.l.b16 %v366
        %v431 = vpack.c.b16 %v424, %v423
        %v432 = vpack.c.b16 %v426, %v425
        %v433 = vpack.c.b16 %v428, %v427
        %v434 = vpack.c.b16 %v430, %v429
        %vm435 = vcmask 261120
        %v437 = vsel %vm435, %v431, 0
        %v440 = vsel %vm435, %v432, 0
        %v443 = vsel %vm435, %v433, 0
        %v446 = vsel %vm435, %v434, 0
        %v449 = vsel %vm435, %v351, 0
        %v452 = vsel %vm435, %v352, 0
        %v455 = vsel %vm435, %v353, 0
        %v458 = vsel %vm435, %v354, 0
        %v461 = vsel %vm435, %v355, 0
        %v464 = vsel %vm435, %v356, 0
        %v467 = vsel %vm435, %v357, 0
        %v470 = vsel %vm435, %v358, 0
        %472 = vmatprep.subr.bf16.mxu0 0
        %473 = vmatpush1.bf16.xpose.msra.mxu0 %v470
        %474 = vmatprep.subr.bf16.mxu0 0
        %475 = vmatpush1.bf16.xpose.msra.mxu0 %v467
        %476 = vmatprep.subr.bf16.mxu0 0
        %477 = vmatpush1.bf16.xpose.msra.mxu0 %v464
        %478 = vmatprep.subr.bf16.mxu0 0
        %479 = vmatpush1.bf16.xpose.msra.mxu0 %v461
        %480 = vmatprep.subr.bf16.mxu0 0
        %481 = vmatpush1.bf16.xpose.msra.mxu0 %v458
        %482 = vmatprep.subr.bf16.mxu0 0
        %483 = vmatpush1.bf16.xpose.msra.mxu0 %v455
        %484 = vmatprep.subr.bf16.mxu0 0
        %485 = vmatpush1.bf16.xpose.msra.mxu0 %v452
        %486 = vmatprep.subr.bf16.mxu0 0
        %487 = vmatpush1.bf16.xpose.msra.mxu0 %v449
        %488 = vmatprep.subr.bf16.mxu0 0
        %489 = vmatpush2.bf16.xpose.msra.mxu0 0
        %490 = vmatprep.subr.bf16.mxu0 0
        %491 = vmatpush2.bf16.xpose.msra.mxu0 0
        %492 = vmatprep.subr.bf16.mxu0 0
        %493 = vmatpush2.bf16.xpose.msra.mxu0 0
        %494 = vmatprep.subr.bf16.mxu0 0
        %495 = vmatpush2.bf16.xpose.msra.mxu0 0
        %496 = vmatprep.subr.bf16.mxu0 0
        %497 = vmatpush2.bf16.xpose.msra.mxu0 0
        %498 = vmatprep.subr.bf16.mxu0 0
        %499 = vmatpush2.bf16.xpose.msra.mxu0 0
        %500 = vmatprep.subr.bf16.mxu0 0
        %501 = vmatpush2.bf16.xpose.msra.mxu0 0
        %502 = vmatprep.subr.bf16.mxu0 0
        %503 = vmatpush2.bf16.xpose.msra.mxu0 0
        %504 = vmatprep.mubr.bf16.mxu0 0
        %505 = vmatmul.mubr.bf16.gmra.mxu0 %v437
        %v506 = vpop.f32.mrf.mxu0
        %v507 = vadd.f32 %v378, %v506
        %v508 = vpop.f32.mrf.mxu0
        %v509 = vpop.f32.mrf.mxu0
        %v510 = vadd.f32 %v383, %v509
        %v511 = vpop.f32.mrf.mxu0
        %512 = vmatprep.mubr.bf16.mxu0 0
        %513 = vmatmul.mubr.bf16.gmra.mxu0 %v440
        %v514 = vpop.f32.mrf.mxu0
        %v515 = vadd.f32 %v388, %v514
        %v516 = vpop.f32.mrf.mxu0
        %v517 = vpop.f32.mrf.mxu0
        %v518 = vadd.f32 %v393, %v517
        %v519 = vpop.f32.mrf.mxu0
        %520 = vmatprep.mubr.bf16.mxu0 0
        %521 = vmatmul.mubr.bf16.gmra.mxu0 %v443
        %v522 = vpop.f32.mrf.mxu0
        %v523 = vadd.f32 %v398, %v522
        %v524 = vpop.f32.mrf.mxu0
        %v525 = vpop.f32.mrf.mxu0
        %v526 = vadd.f32 %v403, %v525
        %v527 = vpop.f32.mrf.mxu0
        %528 = vmatprep.mubr.bf16.mxu0 0
        %529 = vmatmul.mubr.bf16.gmra.mxu0 %v446
        %v530 = vpop.f32.mrf.mxu0
        %v531 = vadd.f32 %v408, %v530
        %v532 = vpop.f32.mrf.mxu0
        %v533 = vpop.f32.mrf.mxu0
        %v534 = vadd.f32 %v413, %v533
        %v535 = vpop.f32.mrf.mxu0
        %536 = vdwg.mxu0
        %v537 = vmax.f32 %v507, 0.0
        %v538 = vmax.f32 %v510, 0.0
        %v539 = vmax.f32 %v515, 0.0
        %v540 = vmax.f32 %v518, 0.0
        %v541 = vmax.f32 %v523, 0.0
        %v542 = vmax.f32 %v526, 0.0
        %v543 = vmax.f32 %v531, 0.0
        %v544 = vmax.f32 %v534, 0.0
        %v545 = vld [vmem:[%s3] sm:$0xf]
        %v546 = vld [vmem:[%s3 + $0x4] sm:$0xf]
        %v547 = vld [vmem:[%s3 + $0x8] sm:$0xf]
        %v548 = vld [vmem:[%s3 + $0xc] sm:$0xf]
        %v549 = vpack.c.bf16 %v538, %v537
        %v550 = vpack.c.bf16 %v540, %v539
        %v551 = vpack.c.bf16 %v542, %v541
        %v552 = vpack.c.bf16 %v544, %v543
        %v553 = vld [vmem:[%s4] sm:$0xff]
        %v554 = vld [vmem:[%s4 + $0x8] sm:$0xff]
        %v555 = vld [vmem:[%s4 + $0x10] sm:$0xff]
        %v556 = vld [vmem:[%s4 + $0x18] sm:$0xff]
        %558 = vset.pattern.permute.xlu0 0
        %559 = vperm.xlu0 %558, %v553
        %v560 = vpop.permute.xlu0 %559
        %563 = vset.pattern.permute.xlu0 0
        %564 = vperm.xlu0 %563, %v554
        %v565 = vpop.permute.xlu0 %564
        %568 = vset.pattern.permute.xlu0 0
        %569 = vperm.xlu0 %568, %v555
        %v570 = vpop.permute.xlu0 %569
        %573 = vset.pattern.permute.xlu0 0
        %574 = vperm.xlu0 %573, %v556
        %v575 = vpop.permute.xlu0 %574
        %v581 = vunpack.c.l.b16 %v545
        %v582 = vunpack.c.l.b16 %v546
        %v583 = vunpack.c.l.b16 %v547
        %v584 = vunpack.c.l.b16 %v548
        %v585 = vpack.c.b16 %v582, %v581
        %v586 = vpack.c.b16 %v584, %v583
        %vm587 = vcmask 523264
        %v589 = vsel %vm587, %v585, 0
        %v592 = vsel %vm587, %v586, 0
        %594 = vmatprep.subr.bf16.mxu0 0
        %595 = vmatpush1.bf16.msra.mxu0 0
        %596 = vmatprep.subr.bf16.mxu0 0
        %597 = vmatpush1.bf16.msra.mxu0 0
        %598 = vmatprep.subr.bf16.mxu0 0
        %599 = vmatpush1.bf16.msra.mxu0 0
        %600 = vmatprep.subr.bf16.mxu0 0
        %601 = vmatpush1.bf16.msra.mxu0 0
        %602 = vmatprep.subr.bf16.mxu0 0
        %603 = vmatpush1.bf16.msra.mxu0 %v552
        %604 = vmatprep.subr.bf16.mxu0 0
        %605 = vmatpush1.bf16.msra.mxu0 %v551
        %606 = vmatprep.subr.bf16.mxu0 0
        %607 = vmatpush1.bf16.msra.mxu0 %v550
        %608 = vmatprep.subr.bf16.mxu0 0
        %609 = vmatpush1.bf16.msra.mxu0 %v549
        %610 = vmatprep.subr.bf16.mxu0 0
        %611 = vmatpush2.bf16.msra.mxu0 0
        %612 = vmatprep.subr.bf16.mxu0 0
        %613 = vmatpush2.bf16.msra.mxu0 0
        %614 = vmatprep.subr.bf16.mxu0 0
        %615 = vmatpush2.bf16.msra.mxu0 0
        %616 = vmatprep.subr.bf16.mxu0 0
        %617 = vmatpush2.bf16.msra.mxu0 0
        %618 = vmatprep.subr.bf16.mxu0 0
        %619 = vmatpush2.bf16.msra.mxu0 0
        %620 = vmatprep.subr.bf16.mxu0 0
        %621 = vmatpush2.bf16.msra.mxu0 0
        %622 = vmatprep.subr.bf16.mxu0 0
        %623 = vmatpush2.bf16.msra.mxu0 0
        %624 = vmatprep.subr.bf16.mxu0 0
        %625 = vmatpush2.bf16.msra.mxu0 0
        %626 = vmatprep.mubr.bf16.mxu0 0
        %627 = vmatmul.mubr.bf16.gmra.mxu0 %v589
        %v628 = vpop.f32.mrf.mxu0
        %v629 = vadd.f32 %v560, %v628
        %v630 = vpop.f32.mrf.mxu0
        %v631 = vpop.f32.mrf.mxu0
        %v632 = vadd.f32 %v565, %v631
        %v633 = vpop.f32.mrf.mxu0
        %634 = vmatprep.mubr.bf16.mxu0 0
        %635 = vmatmul.mubr.bf16.gmra.mxu0 %v592
        %v636 = vpop.f32.mrf.mxu0
        %v637 = vadd.f32 %v570, %v636
        %v638 = vpop.f32.mrf.mxu0
        %v639 = vpop.f32.mrf.mxu0
        %v640 = vadd.f32 %v575, %v639
        %v641 = vpop.f32.mrf.mxu0
        %642 = vdwg.mxu0
        %v643 = vmax.f32 %v629, 0.0
        %v644 = vmax.f32 %v632, 0.0
        %v645 = vmax.f32 %v637, 0.0
        %v646 = vmax.f32 %v640, 0.0
        %v647 = vld [vmem:[%s5] sm:$0xf]
        %v648 = vld [vmem:[%s5 + $0x4] sm:$0xf]
        %v649 = vpack.c.bf16 %v644, %v643
        %v650 = vpack.c.bf16 %v646, %v645
        %v651 = vld [vmem:[%s6] sm:$0xff]
        %v652 = vld [vmem:[%s6 + $0x8] sm:$0xff]
        %654 = vset.pattern.permute.xlu0 0
        %655 = vperm.xlu0 %654, %v651
        %v656 = vpop.permute.xlu0 %655
        %659 = vset.pattern.permute.xlu0 0
        %660 = vperm.xlu0 %659, %v652
        %v661 = vpop.permute.xlu0 %660
        %v665 = vunpack.c.l.b16 %v647
        %v666 = vunpack.c.l.b16 %v648
        %v667 = vpack.c.b16 %v666, %v665
        %v669 = vsel %vm435, %v667, 0
        %671 = vmatprep.subr.bf16.mxu0 0
        %672 = vmatpush1.bf16.msra.mxu0 0
        %673 = vmatprep.subr.bf16.mxu0 0
        %674 = vmatpush1.bf16.msra.mxu0 0
        %675 = vmatprep.subr.bf16.mxu0 0
        %676 = vmatpush1.bf16.msra.mxu0 0
        %677 = vmatprep.subr.bf16.mxu0 0
        %678 = vmatpush1.bf16.msra.mxu0 0
        %679 = vmatprep.subr.bf16.mxu0 0
        %680 = vmatpush1.bf16.msra.mxu0 0
        %681 = vmatprep.subr.bf16.mxu0 0
        %682 = vmatpush1.bf16.msra.mxu0 0
        %683 = vmatprep.subr.bf16.mxu0 0
        %684 = vmatpush1.bf16.msra.mxu0 %v650
        %685 = vmatprep.subr.bf16.mxu0 0
        %686 = vmatpush1.bf16.msra.mxu0 %v649
        %687 = vmatprep.subr.bf16.mxu0 0
        %688 = vmatpush2.bf16.msra.mxu0 0
        %689 = vmatprep.subr.bf16.mxu0 0
        %690 = vmatpush2.bf16.msra.mxu0 0
        %691 = vmatprep.subr.bf16.mxu0 0
        %692 = vmatpush2.bf16.msra.mxu0 0
        %693 = vmatprep.subr.bf16.mxu0 0
        %694 = vmatpush2.bf16.msra.mxu0 0
        %695 = vmatprep.subr.bf16.mxu0 0
        %696 = vmatpush2.bf16.msra.mxu0 0
        %697 = vmatprep.subr.bf16.mxu0 0
        %698 = vmatpush2.bf16.msra.mxu0 0
        %699 = vmatprep.subr.bf16.mxu0 0
        %700 = vmatpush2.bf16.msra.mxu0 0
        %701 = vmatprep.subr.bf16.mxu0 0
        %702 = vmatpush2.bf16.msra.mxu0 0
        %703 = vmatprep.mubr.bf16.mxu0 0
        %704 = vmatmul.mubr.bf16.gmra.mxu0 %v669
        %v705 = vpop.f32.mrf.mxu0
        %v706 = vadd.f32 %v656, %v705
        %v707 = vpop.f32.mrf.mxu0
        %v708 = vpop.f32.mrf.mxu0
        %v709 = vadd.f32 %v661, %v708
        %v710 = vpop.f32.mrf.mxu0
        %711 = vdwg.mxu0
        %v712 = vmax.f32 %v706, 0.0
        %v713 = vmax.f32 %v709, 0.0
        %v714 = vld [vmem:[%s7] sm:$0x1]
        %v715 = vpack.c.bf16 %v713, %v712
        %v716 = vld [vmem:[#allocation2] sm:$0x1]
        %718 = vset.pattern.permute.xlu0 0
        %719 = vperm.xlu0 %718, %v716
        %v720 = vpop.permute.xlu0 %719
        %v722 = vlaneseq
        %v723 = vshrl.u32 %v722, 7
        %v724 = vsub.s32 0, %v723
        %v725 = vrot.slane %v720, %v724
        %vm726 = vcmask 130048
        %v728 = vsel %vm726, %v714, 0
        %730 = vmatprep.subr.bf16.mxu0 0
        %731 = vmatpush1.bf16.msra.mxu0 0
        %732 = vmatprep.subr.bf16.mxu0 0
        %733 = vmatpush1.bf16.msra.mxu0 0
        %734 = vmatprep.subr.bf16.mxu0 0
        %735 = vmatpush1.bf16.msra.mxu0 0
        %736 = vmatprep.subr.bf16.mxu0 0
        %737 = vmatpush1.bf16.msra.mxu0 0
        %738 = vmatprep.subr.bf16.mxu0 0
        %739 = vmatpush1.bf16.msra.mxu0 0
        %740 = vmatprep.subr.bf16.mxu0 0
        %741 = vmatpush1.bf16.msra.mxu0 0
        %742 = vmatprep.subr.bf16.mxu0 0
        %743 = vmatpush1.bf16.msra.mxu0 0
        %744 = vmatprep.subr.bf16.mxu0 0
        %745 = vmatpush1.bf16.msra.mxu0 %v715
        %746 = vmatprep.subr.bf16.mxu0 0
        %747 = vmatpush2.bf16.msra.mxu0 0
        %748 = vmatprep.subr.bf16.mxu0 0
        %749 = vmatpush2.bf16.msra.mxu0 0
        %750 = vmatprep.subr.bf16.mxu0 0
        %751 = vmatpush2.bf16.msra.mxu0 0
        %752 = vmatprep.subr.bf16.mxu0 0
        %753 = vmatpush2.bf16.msra.mxu0 0
        %754 = vmatprep.subr.bf16.mxu0 0
        %755 = vmatpush2.bf16.msra.mxu0 0
        %756 = vmatprep.subr.bf16.mxu0 0
        %757 = vmatpush2.bf16.msra.mxu0 0
        %758 = vmatprep.subr.bf16.mxu0 0
        %759 = vmatpush2.bf16.msra.mxu0 0
        %760 = vmatprep.subr.bf16.mxu0 0
        %761 = vmatpush2.bf16.msra.mxu0 0
        %762 = vmatprep.mubr.bf16.mxu0 0
        %763 = vmatmul.mubr.bf16.gmra.mxu0 %v728
        %v764 = vpop.f32.mrf.mxu0
        %v765 = vadd.f32 %v725, %v764
        %v766 = vpop.f32.mrf.mxu0
        %v767 = vpop.f32.mrf.mxu0
        %v768 = vpop.f32.mrf.mxu0
        %769 = vdwg.mxu0
        %v770 = vsub.f32 0.0, %v765
        %v771 = vmul.f32 %v770, 1.442695
        %v772 = vpow.pop %v771
        %v773 = vadd.f32 %v772, 1.0
        %v774 = vrcp.pop %v773
        %775 = vst [vmem:[%s327] sm:$0x1] %v774
        %s776 = sand.u32 %s227, 1
        %s777 = scalar_lea.sflag [#allocation4], %s776
        %s778 = sand.u32 %s227, 1
        %s779 = scalar_lea.vmem [#allocation3], %s778
        // Predicated region
        $region57: #{tpu_custom_call.1} parent=55 // pred_check
          %p780 = pneg %p237
        $region58: #{tpu_custom_call.1} parent=55 // pred_check_branch
          %782 = sbr.rel (%p780) target = $region60
        $region59: #{tpu_custom_call.1} parent=55 // pred_region
          %s784 = ssub.s32 16, 16
          %785 = vsyncadd %s777, %s784
          %s786 = smul.addr %s25, 16
          %s787 = scalar_lea.hbm %s9, %s786
          %s789 = sshll.u32 %s779, 4
          %s790 = int_to_ptr.vmem [resolvable:$true] %s789
          %792 = dma.vmem_to_hbm [thread:$0]  %s790, 16, %s787, %s777
        $region60: #{tpu_custom_call.1} parent=55 // pred_fallthru
          _
      $region56: #{tpu_custom_call.1} parent=5 // pred_fallthru
        _
      %p793 = scmp.le.s32.totalorder 2, %s20
      // Predicated region
      $region61: #{tpu_custom_call.1} parent=5 // pred_check
        %p794 = pneg %p793
      $region62: #{tpu_custom_call.1} parent=5 // pred_check_branch
        %796 = sbr.rel (%p794) target = $region64
      $region63: #{tpu_custom_call.1} parent=5 // pred_region
        %s797 = ssub.s32 %s20, 2
        // Predicated region
        $region65: #{tpu_custom_call.1} parent=63 // pred_check
          %p798 = pneg %p243
        $region66: #{tpu_custom_call.1} parent=63 // pred_check_branch
          %800 = sbr.rel (%p798) target = $region68
        $region67: #{tpu_custom_call.1} parent=63 // pred_region
          %s801 = sand.u32 %s228, 1
          %s802 = scalar_lea.sflag [#allocation4], %s801
          %s803 = sand.u32 %s228, 1
          %s804 = scalar_lea.vmem [#allocation3], %s803
          %805 = dma.done %s802, 16
        $region68: #{tpu_custom_call.1} parent=63 // pred_fallthru
          _
      $region64: #{tpu_custom_call.1} parent=5 // pred_fallthru
        _
    $region6: #{tpu_custom_call.1} parent=1 // loop_footer
      %s24 = sadd.s32 1, %s20
    $region7: #{tpu_custom_call.1} parent=1 // loop_footer_branch
      %19 = sbr.rel target = $region3
    $region8: #{tpu_custom_call.1} parent=1 // loop_exit
      _
    %806 = vsyncpa [#allocation4], 1
    %s807 = scalar_lea.sflag [#allocation4], 1
    %808 = vsyncpa %s807, 1

</llo_original>
